<compile_context>
chip_gen: v7x
topology: tpu7x:2x2x1
jax: 0.10.0
libtpu: 0.0.40
codegen_flags: <defaults>
</compile_context>

<pallas_src>
import functools

import jax
import jax.numpy as jnp
from jax import lax
from jax.experimental import pallas as pl
from jax.experimental.pallas import tpu as pltpu


_TAPS = tuple((dh, dw) for dh in (-1, 0, 1) for dw in (-1, 0, 1))


def _make_kernel(H, W, C):
    HW = H * W

    def kernel(x_ref, w1_ref, w2_ref, params_ref, mask_ref, o_ref):
        x = x_ref[0]                               # (C, HW) raw input (residual path)
        P = params_ref[...]                        # (C, 5) packed per-channel params
        s1, b1 = P[:, 0:1], P[:, 1:2]              # bn1 scale / bias
        b2, b3 = P[:, 2:3], P[:, 3:4]              # folded bn2 / bn3 biases (per Cout)
        alpha = P[:, 4:5]                          # PReLU slope
        mask = mask_ref[...]                       # (9, HW) border-valid masks

        xb = x * s1 + b1                           # bn1 (eval mode), tiny VPU pass

        def conv3x3(a, wm_ref, bias):
            # Build the (9*Cin, HW) im2col matrix via lane rolls + border masks,
            # then do a single K=36 MXU matmul with lane-dense (Cout, HW) output.
            pieces = []
            for t, (dh, dw) in enumerate(_TAPS):
                s = dh * W + dw                    # flattened spatial shift
                shifted = a if s == 0 else pltpu.roll(a, (-s) % HW, axis=1)
                pieces.append(shifted * mask[t:t + 1, :])
            patches = jnp.concatenate(pieces, axis=0)          # (9*Cin, HW)
            out = jnp.dot(wm_ref[...], patches,
                          preferred_element_type=jnp.float32)  # (Cout, HW)
            return out + bias

        h1 = conv3x3(xb, w1_ref, b2)               # conv1 (+ folded bn2)
        a1 = jnp.where(h1 > 0, h1, alpha * h1)     # act1 = PReLU
        h2 = conv3x3(a1, w2_ref, b3)               # conv2 (+ folded bn3)
        o_ref[0] = (h2 + x).astype(o_ref.dtype)    # residual add (downsample=None)
        # TODO(synk): stride>1 / downsample path not implemented — with
        # downsample=None the residual add only applies for stride=1, inplanes==planes.

    return kernel


def basic_block(x_nhwc, w1, w2, s1, b1, s2, b2, s3, b3, alpha):
    """x_nhwc: (N,H,W,C); w1,w2: HWIO (3,3,C,C); bn params / alpha: per-channel."""
    N, H, W, C = x_nhwc.shape
    HW = H * W

    # Lane-dense HBM layout: (N, C, H*W) — contiguous 1 KiB rows, HW on lanes.
    x_cl = jnp.transpose(x_nhwc, (0, 3, 1, 2)).reshape(N, C, HW).astype(jnp.float32)

    # Fold bn2 / bn3 per-Cout scales into the conv weights and reshape to the
    # im2col form (Cout, 9*Cin); tap order matches _TAPS (row-major over 3x3).
    def fold_w(w, s_out):
        wf = w.astype(jnp.float32) * s_out.reshape(1, 1, 1, -1)
        return jnp.transpose(wf.reshape(9 * C, C), (1, 0))     # (Cout, 9*Cin)

    w1m = fold_w(w1, s2.reshape(-1))
    w2m = fold_w(w2, s3.reshape(-1))

    # Pack all per-channel vectors into one (C, 5) tile: [s1, b1, b2, b3, alpha].
    params = jnp.stack(
        [s1.reshape(-1), b1.reshape(-1), b2.reshape(-1), b3.reshape(-1),
         jnp.broadcast_to(alpha.reshape(-1), (C,))],
        axis=1).astype(jnp.float32)

    # Border-valid masks for the 9 taps of a 3x3 SAME conv, over flattened HW.
    p = jnp.arange(HW)
    hh, ww = p // W, p % W
    mask = jnp.stack(
        [((hh + dh >= 0) & (hh + dh < H) & (ww + dw >= 0) & (ww + dw < W))
         for (dh, dw) in _TAPS],
        axis=0).astype(jnp.float32)                             # (9, HW)

    kernel = _make_kernel(H, W, C)
    out_cl = pl.pallas_call(
        kernel,
        out_shape=jax.ShapeDtypeStruct((N, C, HW), jnp.float32),
        grid_spec=pltpu.PrefetchScalarGridSpec(
            num_scalar_prefetch=0,
            grid=(N,),
            in_specs=[
                pl.BlockSpec((1, C, HW), lambda n: (n, 0, 0)),   # x, lane-dense
                pl.BlockSpec((C, 9 * C), lambda n: (0, 0)),      # conv1 weight (im2col)
                pl.BlockSpec((C, 9 * C), lambda n: (0, 0)),      # conv2 weight (im2col)
                pl.BlockSpec((C, 5), lambda n: (0, 0)),          # packed per-channel params
                pl.BlockSpec((9, HW), lambda n: (0, 0)),         # border masks
            ],
            out_specs=pl.BlockSpec((1, C, HW), lambda n: (n, 0, 0)),
        ),
        compiler_params=pltpu.CompilerParams(dimension_semantics=("parallel",)),
    )(x_cl, w1m, w2m, params, mask)

    # Back to NHWC on the HBM side (pure layout plumbing in the wrapper).
    return jnp.transpose(out_cl.reshape(N, C, H, W), (0, 2, 3, 1))


def _fold_bn(gamma, beta, mean, var, eps):
    scale = gamma / jnp.sqrt(var + eps)
    bias = beta - mean * scale
    return scale.astype(jnp.float32), bias.astype(jnp.float32)


def _reference(x, w1, w2, s1, b1, s2, b2, s3, b3, alpha):
    dn = ("NHWC", "HWIO", "NHWC")

    def bn(v, s, b):
        return v * s.reshape(1, 1, 1, -1) + b.reshape(1, 1, 1, -1)

    out = bn(x, s1, b1)
    out = lax.conv_general_dilated(out, w1, (1, 1), "SAME", dimension_numbers=dn)
    out = bn(out, s2, b2)
    out = jnp.where(out > 0, out, alpha.reshape(1, 1, 1, -1) * out)
    out = lax.conv_general_dilated(out, w2, (1, 1), "SAME", dimension_numbers=dn)
    out = bn(out, s3, b3)
    return out + x


if __name__ == "__main__":
    # Small shapes: batch=2, inplanes=planes=4, spatial=16, stride=1.
    N, C, H, W = 2, 4, 16, 16
    bn_eps = 2e-5

    key = jax.random.PRNGKey(0)
    keys = jax.random.split(key, 16)

    x = jax.random.normal(keys[0], (N, H, W, C), jnp.float32)          # NHWC input
    w1 = jax.random.normal(keys[1], (3, 3, C, C), jnp.float32) * 0.1   # HWIO
    w2 = jax.random.normal(keys[2], (3, 3, C, C), jnp.float32) * 0.1   # HWIO

    def bn_params(k):
        ka, kb, kc, kd = jax.random.split(k, 4)
        gamma = 1.0 + 0.1 * jax.random.normal(ka, (C,), jnp.float32)
        beta = 0.1 * jax.random.normal(kb, (C,), jnp.float32)
        mean = 0.1 * jax.random.normal(kc, (C,), jnp.float32)
        var = 0.5 + jax.random.uniform(kd, (C,), jnp.float32)
        return _fold_bn(gamma, beta, mean, var, bn_eps)

    s1, b1 = bn_params(keys[3])
    s2, b2 = bn_params(keys[4])
    s3, b3 = bn_params(keys[5])

    # PReLU: single learnable slope (PyTorch default init 0.25), broadcast to channels.
    alpha = jnp.full((C,), 0.25, jnp.float32)

    out = basic_block(x, w1, w2, s1, b1, s2, b2, s3, b3, alpha)
    out = jax.block_until_ready(out)

    ref = _reference(x, w1, w2, s1, b1, s2, b2, s3, b3, alpha)
    assert out.shape == (N, H, W, C)
    assert jnp.allclose(out, ref, atol=1e-4, rtol=1e-4), float(jnp.max(jnp.abs(out - ref)))
    print("KERNEL_OK")
</pallas_src>

<mosaic_0001>
module attributes {stable_mosaic.version = 11 : i64} {
  func.func @kernel(%arg0: i32, %arg1: memref<1x4x256xf32, #tpu.memory_space<vmem>>, %arg2: memref<4x36xf32, #tpu.memory_space<vmem>>, %arg3: memref<4x36xf32, #tpu.memory_space<vmem>>, %arg4: memref<4x5xf32, #tpu.memory_space<vmem>>, %arg5: memref<9x256xf32, #tpu.memory_space<vmem>>, %arg6: memref<1x4x256xf32, #tpu.memory_space<vmem>>) attributes {dimension_semantics = [#tpu.dimension_semantics<parallel>], iteration_bounds = array<i64: 2>, scalar_prefetch = 0 : i64, scratch_operands = 0 : i64, tpu.core_type = #tpu.core_type<tc>, window_params = [{transform_indices = @transform_0, window_bounds = array<i64: 1, 4, 256>}, {pipeline_mode = #tpu.pipeline_mode<synchronous>, transform_indices = @transform_1, window_bounds = array<i64: 4, 36>}, {pipeline_mode = #tpu.pipeline_mode<synchronous>, transform_indices = @transform_2, window_bounds = array<i64: 4, 36>}, {pipeline_mode = #tpu.pipeline_mode<synchronous>, transform_indices = @transform_3, window_bounds = array<i64: 4, 5>}, {pipeline_mode = #tpu.pipeline_mode<synchronous>, transform_indices = @transform_4, window_bounds = array<i64: 9, 256>}, {transform_indices = @transform_5, window_bounds = array<i64: 1, 4, 256>}]} {
    %c0 = arith.constant 0 : index
    %c0_0 = arith.constant 0 : index
    %c0_1 = arith.constant 0 : index
    %0 = vector.load %arg1[%c0, %c0_0, %c0_1] : memref<1x4x256xf32, #tpu.memory_space<vmem>>, vector<1x4x256xf32>
    %1 = vector.shape_cast %0 : vector<1x4x256xf32> to vector<4x256xf32>
    %c0_2 = arith.constant 0 : index
    %c0_3 = arith.constant 0 : index
    %2 = vector.load %arg4[%c0_2, %c0_3] : memref<4x5xf32, #tpu.memory_space<vmem>>, vector<4x5xf32>
    %3 = vector.extract_strided_slice %2 {offsets = [0, 0], sizes = [4, 1], strides = [1, 1]} : vector<4x5xf32> to vector<4x1xf32>
    %4 = vector.extract_strided_slice %2 {offsets = [0, 1], sizes = [4, 1], strides = [1, 1]} : vector<4x5xf32> to vector<4x1xf32>
    %5 = vector.extract_strided_slice %2 {offsets = [0, 2], sizes = [4, 1], strides = [1, 1]} : vector<4x5xf32> to vector<4x1xf32>
    %6 = vector.extract_strided_slice %2 {offsets = [0, 3], sizes = [4, 1], strides = [1, 1]} : vector<4x5xf32> to vector<4x1xf32>
    %7 = vector.extract_strided_slice %2 {offsets = [0, 4], sizes = [4, 1], strides = [1, 1]} : vector<4x5xf32> to vector<4x1xf32>
    %c0_4 = arith.constant 0 : index
    %c0_5 = arith.constant 0 : index
    %8 = vector.load %arg5[%c0_4, %c0_5] : memref<9x256xf32, #tpu.memory_space<vmem>>, vector<9x256xf32>
    %9 = vector.broadcast %3 : vector<4x1xf32> to vector<4x256xf32>
    %10 = arith.mulf %1, %9 : vector<4x256xf32>
    %11 = vector.broadcast %4 : vector<4x1xf32> to vector<4x256xf32>
    %12 = arith.addf %10, %11 : vector<4x256xf32>
    %c17_i32 = arith.constant 17 : i32
    %13 = tpu.dynamic_rotate %12 by %c17_i32 dim 1 : vector<4x256xf32>, i32 -> vector<4x256xf32>
    %14 = vector.extract_strided_slice %8 {offsets = [0, 0], sizes = [1, 256], strides = [1, 1]} : vector<9x256xf32> to vector<1x256xf32>
    %15 = vector.broadcast %14 : vector<1x256xf32> to vector<4x256xf32>
    %16 = arith.mulf %13, %15 : vector<4x256xf32>
    %c16_i32 = arith.constant 16 : i32
    %17 = tpu.dynamic_rotate %12 by %c16_i32 dim 1 : vector<4x256xf32>, i32 -> vector<4x256xf32>
    %18 = vector.extract_strided_slice %8 {offsets = [1, 0], sizes = [1, 256], strides = [1, 1]} : vector<9x256xf32> to vector<1x256xf32>
    %19 = vector.broadcast %18 : vector<1x256xf32> to vector<4x256xf32>
    %20 = arith.mulf %17, %19 : vector<4x256xf32>
    %c15_i32 = arith.constant 15 : i32
    %21 = tpu.dynamic_rotate %12 by %c15_i32 dim 1 : vector<4x256xf32>, i32 -> vector<4x256xf32>
    %22 = vector.extract_strided_slice %8 {offsets = [2, 0], sizes = [1, 256], strides = [1, 1]} : vector<9x256xf32> to vector<1x256xf32>
    %23 = vector.broadcast %22 : vector<1x256xf32> to vector<4x256xf32>
    %24 = arith.mulf %21, %23 : vector<4x256xf32>
    %c1_i32 = arith.constant 1 : i32
    %25 = tpu.dynamic_rotate %12 by %c1_i32 dim 1 : vector<4x256xf32>, i32 -> vector<4x256xf32>
    %26 = vector.extract_strided_slice %8 {offsets = [3, 0], sizes = [1, 256], strides = [1, 1]} : vector<9x256xf32> to vector<1x256xf32>
    %27 = vector.broadcast %26 : vector<1x256xf32> to vector<4x256xf32>
    %28 = arith.mulf %25, %27 : vector<4x256xf32>
    %29 = vector.extract_strided_slice %8 {offsets = [4, 0], sizes = [1, 256], strides = [1, 1]} : vector<9x256xf32> to vector<1x256xf32>
    %30 = vector.broadcast %29 : vector<1x256xf32> to vector<4x256xf32>
    %31 = arith.mulf %12, %30 : vector<4x256xf32>
    %c255_i32 = arith.constant 255 : i32
    %32 = tpu.dynamic_rotate %12 by %c255_i32 dim 1 : vector<4x256xf32>, i32 -> vector<4x256xf32>
    %33 = vector.extract_strided_slice %8 {offsets = [5, 0], sizes = [1, 256], strides = [1, 1]} : vector<9x256xf32> to vector<1x256xf32>
    %34 = vector.broadcast %33 : vector<1x256xf32> to vector<4x256xf32>
    %35 = arith.mulf %32, %34 : vector<4x256xf32>
    %c241_i32 = arith.constant 241 : i32
    %36 = tpu.dynamic_rotate %12 by %c241_i32 dim 1 : vector<4x256xf32>, i32 -> vector<4x256xf32>
    %37 = vector.extract_strided_slice %8 {offsets = [6, 0], sizes = [1, 256], strides = [1, 1]} : vector<9x256xf32> to vector<1x256xf32>
    %38 = vector.broadcast %37 : vector<1x256xf32> to vector<4x256xf32>
    %39 = arith.mulf %36, %38 : vector<4x256xf32>
    %c240_i32 = arith.constant 240 : i32
    %40 = tpu.dynamic_rotate %12 by %c240_i32 dim 1 : vector<4x256xf32>, i32 -> vector<4x256xf32>
    %41 = vector.extract_strided_slice %8 {offsets = [7, 0], sizes = [1, 256], strides = [1, 1]} : vector<9x256xf32> to vector<1x256xf32>
    %42 = vector.broadcast %41 : vector<1x256xf32> to vector<4x256xf32>
    %43 = arith.mulf %40, %42 : vector<4x256xf32>
    %c239_i32 = arith.constant 239 : i32
    %44 = tpu.dynamic_rotate %12 by %c239_i32 dim 1 : vector<4x256xf32>, i32 -> vector<4x256xf32>
    %45 = vector.extract_strided_slice %8 {offsets = [8, 0], sizes = [1, 256], strides = [1, 1]} : vector<9x256xf32> to vector<1x256xf32>
    %46 = vector.broadcast %45 : vector<1x256xf32> to vector<4x256xf32>
    %47 = arith.mulf %44, %46 : vector<4x256xf32>
    %48 = tpu.concatenate %16, %20, %24, %28, %31, %35, %39, %43, %47 in 0 : vector<4x256xf32>, vector<4x256xf32>, vector<4x256xf32>, vector<4x256xf32>, vector<4x256xf32>, vector<4x256xf32>, vector<4x256xf32>, vector<4x256xf32>, vector<4x256xf32> -> vector<36x256xf32>
    %c0_6 = arith.constant 0 : index
    %c0_7 = arith.constant 0 : index
    %49 = vector.load %arg2[%c0_6, %c0_7] : memref<4x36xf32, #tpu.memory_space<vmem>>, vector<4x36xf32>
    %cst = arith.constant dense<0.000000e+00> : vector<4x256xf32>
    %50 = tpu.matmul %49, %48, %cst {dimension_numbers = #tpu.dot_dimension_numbers<[1], [0], [0], [1], [0, 0, 1, 1], [], []>} : vector<4x36xf32>, vector<36x256xf32>, vector<4x256xf32> -> vector<4x256xf32>
    %51 = vector.broadcast %5 : vector<4x1xf32> to vector<4x256xf32>
    %52 = arith.addf %50, %51 : vector<4x256xf32>
    %cst_8 = arith.constant 0.000000e+00 : f32
    %53 = vector.broadcast %cst_8 : f32 to vector<4x256xf32>
    %54 = arith.cmpf ogt, %52, %53 : vector<4x256xf32>
    %55 = vector.broadcast %7 : vector<4x1xf32> to vector<4x256xf32>
    %56 = arith.mulf %55, %52 : vector<4x256xf32>
    %57 = arith.select %54, %52, %56 : vector<4x256xi1>, vector<4x256xf32>
    %c17_i32_9 = arith.constant 17 : i32
    %58 = tpu.dynamic_rotate %57 by %c17_i32_9 dim 1 : vector<4x256xf32>, i32 -> vector<4x256xf32>
    %59 = vector.extract_strided_slice %8 {offsets = [0, 0], sizes = [1, 256], strides = [1, 1]} : vector<9x256xf32> to vector<1x256xf32>
    %60 = vector.broadcast %59 : vector<1x256xf32> to vector<4x256xf32>
    %61 = arith.mulf %58, %60 : vector<4x256xf32>
    %c16_i32_10 = arith.constant 16 : i32
    %62 = tpu.dynamic_rotate %57 by %c16_i32_10 dim 1 : vector<4x256xf32>, i32 -> vector<4x256xf32>
    %63 = vector.extract_strided_slice %8 {offsets = [1, 0], sizes = [1, 256], strides = [1, 1]} : vector<9x256xf32> to vector<1x256xf32>
    %64 = vector.broadcast %63 : vector<1x256xf32> to vector<4x256xf32>
    %65 = arith.mulf %62, %64 : vector<4x256xf32>
    %c15_i32_11 = arith.constant 15 : i32
    %66 = tpu.dynamic_rotate %57 by %c15_i32_11 dim 1 : vector<4x256xf32>, i32 -> vector<4x256xf32>
    %67 = vector.extract_strided_slice %8 {offsets = [2, 0], sizes = [1, 256], strides = [1, 1]} : vector<9x256xf32> to vector<1x256xf32>
    %68 = vector.broadcast %67 : vector<1x256xf32> to vector<4x256xf32>
    %69 = arith.mulf %66, %68 : vector<4x256xf32>
    %c1_i32_12 = arith.constant 1 : i32
    %70 = tpu.dynamic_rotate %57 by %c1_i32_12 dim 1 : vector<4x256xf32>, i32 -> vector<4x256xf32>
    %71 = vector.extract_strided_slice %8 {offsets = [3, 0], sizes = [1, 256], strides = [1, 1]} : vector<9x256xf32> to vector<1x256xf32>
    %72 = vector.broadcast %71 : vector<1x256xf32> to vector<4x256xf32>
    %73 = arith.mulf %70, %72 : vector<4x256xf32>
    %74 = vector.extract_strided_slice %8 {offsets = [4, 0], sizes = [1, 256], strides = [1, 1]} : vector<9x256xf32> to vector<1x256xf32>
    %75 = vector.broadcast %74 : vector<1x256xf32> to vector<4x256xf32>
    %76 = arith.mulf %57, %75 : vector<4x256xf32>
    %c255_i32_13 = arith.constant 255 : i32
    %77 = tpu.dynamic_rotate %57 by %c255_i32_13 dim 1 : vector<4x256xf32>, i32 -> vector<4x256xf32>
    %78 = vector.extract_strided_slice %8 {offsets = [5, 0], sizes = [1, 256], strides = [1, 1]} : vector<9x256xf32> to vector<1x256xf32>
    %79 = vector.broadcast %78 : vector<1x256xf32> to vector<4x256xf32>
    %80 = arith.mulf %77, %79 : vector<4x256xf32>
    %c241_i32_14 = arith.constant 241 : i32
    %81 = tpu.dynamic_rotate %57 by %c241_i32_14 dim 1 : vector<4x256xf32>, i32 -> vector<4x256xf32>
    %82 = vector.extract_strided_slice %8 {offsets = [6, 0], sizes = [1, 256], strides = [1, 1]} : vector<9x256xf32> to vector<1x256xf32>
    %83 = vector.broadcast %82 : vector<1x256xf32> to vector<4x256xf32>
    %84 = arith.mulf %81, %83 : vector<4x256xf32>
    %c240_i32_15 = arith.constant 240 : i32
    %85 = tpu.dynamic_rotate %57 by %c240_i32_15 dim 1 : vector<4x256xf32>, i32 -> vector<4x256xf32>
    %86 = vector.extract_strided_slice %8 {offsets = [7, 0], sizes = [1, 256], strides = [1, 1]} : vector<9x256xf32> to vector<1x256xf32>
    %87 = vector.broadcast %86 : vector<1x256xf32> to vector<4x256xf32>
    %88 = arith.mulf %85, %87 : vector<4x256xf32>
    %c239_i32_16 = arith.constant 239 : i32
    %89 = tpu.dynamic_rotate %57 by %c239_i32_16 dim 1 : vector<4x256xf32>, i32 -> vector<4x256xf32>
    %90 = vector.extract_strided_slice %8 {offsets = [8, 0], sizes = [1, 256], strides = [1, 1]} : vector<9x256xf32> to vector<1x256xf32>
    %91 = vector.broadcast %90 : vector<1x256xf32> to vector<4x256xf32>
    %92 = arith.mulf %89, %91 : vector<4x256xf32>
    %93 = tpu.concatenate %61, %65, %69, %73, %76, %80, %84, %88, %92 in 0 : vector<4x256xf32>, vector<4x256xf32>, vector<4x256xf32>, vector<4x256xf32>, vector<4x256xf32>, vector<4x256xf32>, vector<4x256xf32>, vector<4x256xf32>, vector<4x256xf32> -> vector<36x256xf32>
    %c0_17 = arith.constant 0 : index
    %c0_18 = arith.constant 0 : index
    %94 = vector.load %arg3[%c0_17, %c0_18] : memref<4x36xf32, #tpu.memory_space<vmem>>, vector<4x36xf32>
    %cst_19 = arith.constant dense<0.000000e+00> : vector<4x256xf32>
    %95 = tpu.matmul %94, %93, %cst_19 {dimension_numbers = #tpu.dot_dimension_numbers<[1], [0], [0], [1], [0, 0, 1, 1], [], []>} : vector<4x36xf32>, vector<36x256xf32>, vector<4x256xf32> -> vector<4x256xf32>
    %96 = vector.broadcast %6 : vector<4x1xf32> to vector<4x256xf32>
    %97 = arith.addf %95, %96 : vector<4x256xf32>
    %98 = arith.addf %97, %1 : vector<4x256xf32>
    %c0_20 = arith.constant 0 : index
    %c0_21 = arith.constant 0 : index
    %c0_22 = arith.constant 0 : index
    %99 = vector.load %arg6[%c0_20, %c0_21, %c0_22] : memref<1x4x256xf32, #tpu.memory_space<vmem>>, vector<1x4x256xf32>
    %100 = vector.shape_cast %99 : vector<1x4x256xf32> to vector<4x256xf32>
    %101 = vector.shape_cast %98 : vector<4x256xf32> to vector<1x4x256xf32>
    tpu.vector_store %arg6[%c0_20, %c0_21, %c0_22], %101 {strides = array<i32>} : memref<1x4x256xf32, #tpu.memory_space<vmem>>, vector<1x4x256xf32>,
    return
  }
  func.func @transform_0(%arg0: i32) -> (i32, i32, i32) {
    %c0_i32 = arith.constant 0 : i32
    %c0_i32_0 = arith.constant 0 : i32
    %c0_i32_1 = arith.constant 0 : i32
    return %arg0, %c0_i32, %c0_i32_0 : i32, i32, i32
  }
  func.func @transform_1(%arg0: i32) -> (i32, i32) {
    %c0_i32 = arith.constant 0 : i32
    %c0_i32_0 = arith.constant 0 : i32
    %c0_i32_1 = arith.constant 0 : i32
    return %c0_i32, %c0_i32_0 : i32, i32
  }
  func.func @transform_2(%arg0: i32) -> (i32, i32) {
    %c0_i32 = arith.constant 0 : i32
    %c0_i32_0 = arith.constant 0 : i32
    %c0_i32_1 = arith.constant 0 : i32
    return %c0_i32, %c0_i32_0 : i32, i32
  }
  func.func @transform_3(%arg0: i32) -> (i32, i32) {
    %c0_i32 = arith.constant 0 : i32
    %c0_i32_0 = arith.constant 0 : i32
    %c0_i32_1 = arith.constant 0 : i32
    return %c0_i32, %c0_i32_0 : i32, i32
  }
  func.func @transform_4(%arg0: i32) -> (i32, i32) {
    %c0_i32 = arith.constant 0 : i32
    %c0_i32_0 = arith.constant 0 : i32
    %c0_i32_1 = arith.constant 0 : i32
    return %c0_i32, %c0_i32_0 : i32, i32
  }
  func.func @transform_5(%arg0: i32) -> (i32, i32, i32) {
    %c0_i32 = arith.constant 0 : i32
    %c0_i32_0 = arith.constant 0 : i32
    %c0_i32_1 = arith.constant 0 : i32
    return %arg0, %c0_i32, %c0_i32_0 : i32, i32, i32
  }
}

</mosaic_0001>

<llo_original>
// kernel: tpu_custom_call.1
$region0: #{tpu_custom_call.1}
  #allocation0 [shape = 'u32[]', space=smem, size = 0x4, offset = 0x4, fixed_abs, tag = 'smem constant byte address 0x4 - core index']
  #allocation1 [shape = 'u32[144,128]{1,0:T(1,128)}', space=vmem, size = 0x12000, scoped, tag = 'internal scratch']
  %s0 = inlined_call_operand.hbm [shape: f32[2,4,256], index: 0, kind: input, shape index: {}]
  %s1 = inlined_call_operand.hbm [shape: f32[4,36], index: 1, kind: input, shape index: {}]
  %s2 = inlined_call_operand.vmem [shape: f32[4,36], index: 2, kind: input, shape index: {}]
  %s3 = inlined_call_operand.vmem [shape: f32[4,5], index: 3, kind: input, shape index: {}]
  %s4 = inlined_call_operand.hbm [shape: f32[9,256], index: 4, kind: input, shape index: {}]
  %s5 = inlined_call_operand.hbm [shape: f32[2,4,256], index: 5, kind: output, shape index: {}]
  %s6 = sld [smem:[#allocation0]]
  $region65: #{tpu_custom_call.1} parent=0
    _
  %s8 = ssub.s32 1, %s6
  %s9 = scalar_select 0, %s8, %s6
  $region1: #{tpu_custom_call.1} parent=0
    #allocation2 [shape = 'u8[8192]{0}', space=vmem, size = 0x2000, scoped, tag = 'input window, operand 0']
    #allocation3 [shape = 's32[2]{0}', space=sflag, size = 0x8, scoped, tag = 'scoped memory for tpu_custom_call.1']
    #allocation4 [shape = 's32[2]{0}', space=sflag, size = 0x8, scoped, tag = 'scoped memory for tpu_custom_call.1']
    #allocation5 [shape = 'u8[2048]{0}', space=vmem, size = 0x800, scoped, tag = 'input window, operand 1, single buffered']
    #allocation6 [shape = 's32[1]{0}', space=sflag, size = 0x4, scoped, tag = 'scoped memory for tpu_custom_call.1']
    #allocation7 [shape = 'u8[16384]{0}', space=vmem, size = 0x4000, scoped, tag = 'input window, operand 4, single buffered']
    #allocation8 [shape = 'u8[8192]{0}', space=vmem, size = 0x2000, scoped, tag = 'output window, operand 0']
    %10 = vsyncpa [#allocation3], 0
    %s11 = scalar_lea.sflag [#allocation3], 1
    %12 = vsyncpa %s11, 0
    %13 = vsyncpa [#allocation6], 0
    %14 = vsyncpa [#allocation4], 0
    %s15 = scalar_lea.sflag [#allocation4], 1
    %16 = vsyncpa %s15, 0
    loop: start=0, step=1, limit=4
    $region2: #{tpu_custom_call.1} parent=1 // loop_pre_header
      _
    $region3: #{tpu_custom_call.1} parent=1 // loop_header
      %s18 = sphi 0, %s22
      %p19 = scmp.ge.s32.totalorder %s18, 4
      %s28 = sphi 0, %s30
      %s31 = sphi 0, %s28
      %s32 = sphi 0, %s31
      %s48 = sphi 0, %s32
      %s52 = sphi 0, %s52
      %s54 = sphi 0, %s52
      %s55 = sphi 0, %s54
      %s69 = sphi 0, %s55
      %s73 = sphi 0, %s73
      %s75 = sphi 0, %s73
      %s76 = sphi 0, %s75
      %s90 = sphi 0, %s76
      %s94 = sphi 0, %s94
      %s96 = sphi 0, %s94
      %s97 = sphi 0, %s96
      %s111 = sphi 0, %s97
      %s115 = sphi 0, %s115
      %s117 = sphi 0, %s115
      %s118 = sphi 0, %s117
      %s132 = sphi 0, %s118
      %s138 = sphi 0, %s140
      %s141 = sphi 0, %s138
      %s142 = sphi 0, %s141
      %s158 = sphi 0, %s142
    $region4: #{tpu_custom_call.1} parent=1 // loop_header_branch
      %21 = sbr.rel (%p19) target = $region8
    $region5: #{tpu_custom_call.1} parent=1 // loop_body
      %s23 = ssub.s32 %s18, 1
      %s24 = ssub.s32 %s18, 2
      %s25 = sadd.s32 %s18, 1
      %s26 = ssub.s32 %s18, %s25
      %p27 = scmp.eq.s32.totalorder %s26, 0
      %s29 = sadd.s32 %s28, 1
      %s30 = scalar_select %p27, %s28, %s29
      %p33 = pneg %p27
      %p34 = scmp.eq.s32.totalorder %s18, 1
      %p35 = por %p33, %p34
      %p36 = scmp.ne.s32.totalorder %s28, %s31
      %p37 = scmp.eq.s32.totalorder %s18, 0
      %p38 = por %p36, %p37
      %p39 = scmp.ne.s32.totalorder %s28, %s31
      %p40 = scmp.eq.s32.totalorder %s23, 1
      %p41 = por %p39, %p40
      %p42 = scmp.ne.s32.totalorder %s31, %s32
      %p43 = scmp.eq.s32.totalorder %s23, 0
      %p44 = por %p42, %p43
      %p45 = scmp.ne.s32.totalorder %s31, %s32
      %p46 = scmp.eq.s32.totalorder %s24, 1
      %p47 = por %p45, %p46
      %p49 = scmp.ne.s32.totalorder %s32, %s48
      %p50 = scmp.eq.s32.totalorder %s24, 0
      %p51 = por %p49, %p50
      %s53 = sadd.s32 %s52, 1
      %p56 = scmp.eq.s32.totalorder %s18, 1
      %p57 = scmp.ne.s32.totalorder %s52, %s54
      %p58 = scmp.eq.s32.totalorder %s18, 0
      %p59 = por %p57, %p58
      %p60 = scmp.ne.s32.totalorder %s52, %s54
      %p61 = scmp.eq.s32.totalorder %s23, 1
      %p62 = por %p60, %p61
      %p63 = scmp.ne.s32.totalorder %s54, %s55
      %p64 = scmp.eq.s32.totalorder %s23, 0
      %p65 = por %p63, %p64
      %p66 = scmp.ne.s32.totalorder %s54, %s55
      %p67 = scmp.eq.s32.totalorder %s24, 1
      %p68 = por %p66, %p67
      %p70 = scmp.ne.s32.totalorder %s55, %s69
      %p71 = scmp.eq.s32.totalorder %s24, 0
      %p72 = por %p70, %p71
      %s74 = sadd.s32 %s73, 1
      %p77 = scmp.eq.s32.totalorder %s18, 1
      %p78 = scmp.ne.s32.totalorder %s73, %s75
      %p79 = scmp.eq.s32.totalorder %s18, 0
      %p80 = por %p78, %p79
      %p81 = scmp.ne.s32.totalorder %s73, %s75
      %p82 = scmp.eq.s32.totalorder %s23, 1
      %p83 = por %p81, %p82
      %p84 = scmp.ne.s32.totalorder %s75, %s76
      %p85 = scmp.eq.s32.totalorder %s23, 0
      %p86 = por %p84, %p85
      %p87 = scmp.ne.s32.totalorder %s75, %s76
      %p88 = scmp.eq.s32.totalorder %s24, 1
      %p89 = por %p87, %p88
      %p91 = scmp.ne.s32.totalorder %s76, %s90
      %p92 = scmp.eq.s32.totalorder %s24, 0
      %p93 = por %p91, %p92
      %s95 = sadd.s32 %s94, 1
      %p98 = scmp.eq.s32.totalorder %s18, 1
      %p99 = scmp.ne.s32.totalorder %s94, %s96
      %p100 = scmp.eq.s32.totalorder %s18, 0
      %p101 = por %p99, %p100
      %p102 = scmp.ne.s32.totalorder %s94, %s96
      %p103 = scmp.eq.s32.totalorder %s23, 1
      %p104 = por %p102, %p103
      %p105 = scmp.ne.s32.totalorder %s96, %s97
      %p106 = scmp.eq.s32.totalorder %s23, 0
      %p107 = por %p105, %p106
      %p108 = scmp.ne.s32.totalorder %s96, %s97
      %p109 = scmp.eq.s32.totalorder %s24, 1
      %p110 = por %p108, %p109
      %p112 = scmp.ne.s32.totalorder %s97, %s111
      %p113 = scmp.eq.s32.totalorder %s24, 0
      %p114 = por %p112, %p113
      %s116 = sadd.s32 %s115, 1
      %p119 = scmp.eq.s32.totalorder %s18, 1
      %p120 = scmp.ne.s32.totalorder %s115, %s117
      %p121 = scmp.eq.s32.totalorder %s18, 0
      %p122 = por %p120, %p121
      %p123 = scmp.ne.s32.totalorder %s115, %s117
      %p124 = scmp.eq.s32.totalorder %s23, 1
      %p125 = por %p123, %p124
      %p126 = scmp.ne.s32.totalorder %s117, %s118
      %p127 = scmp.eq.s32.totalorder %s23, 0
      %p128 = por %p126, %p127
      %p129 = scmp.ne.s32.totalorder %s117, %s118
      %p130 = scmp.eq.s32.totalorder %s24, 1
      %p131 = por %p129, %p130
      %p133 = scmp.ne.s32.totalorder %s118, %s132
      %p134 = scmp.eq.s32.totalorder %s24, 0
      %p135 = por %p133, %p134
      %s136 = ssub.s32 %s18, %s25
      %p137 = scmp.eq.s32.totalorder %s136, 0
      %s139 = sadd.s32 %s138, 1
      %s140 = scalar_select %p137, %s138, %s139
      %p143 = pneg %p137
      %p144 = scmp.eq.s32.totalorder %s18, 1
      %p145 = por %p143, %p144
      %p146 = scmp.ne.s32.totalorder %s138, %s141
      %p147 = scmp.eq.s32.totalorder %s18, 0
      %p148 = por %p146, %p147
      %p149 = scmp.ne.s32.totalorder %s138, %s141
      %p150 = scmp.eq.s32.totalorder %s23, 1
      %p151 = por %p149, %p150
      %p152 = scmp.ne.s32.totalorder %s141, %s142
      %p153 = scmp.eq.s32.totalorder %s23, 0
      %p154 = por %p152, %p153
      %p155 = scmp.ne.s32.totalorder %s141, %s142
      %p156 = scmp.eq.s32.totalorder %s24, 1
      %p157 = por %p155, %p156
      %p159 = scmp.ne.s32.totalorder %s142, %s158
      %p160 = scmp.eq.s32.totalorder %s24, 0
      %p161 = por %p159, %p160
      %p162 = scmp.le.s32.totalorder 1, %s18
      %p163 = scmp.lt.s32.totalorder %s18, 3
      %p164 = pnand %p162, %p163
      %p165 = pneg %p164
      // Predicated region
      $region9: #{tpu_custom_call.1} parent=5 // pred_check
        _
      $region10: #{tpu_custom_call.1} parent=5 // pred_check_branch
        %167 = sbr.rel (%p164) target = $region12
      $region11: #{tpu_custom_call.1} parent=5 // pred_region
        %s168 = ssub.s32 %s18, 1
        // Predicated region
        $region13: #{tpu_custom_call.1} parent=11 // pred_check
          %p169 = pneg %p65
        $region14: #{tpu_custom_call.1} parent=11 // pred_check_branch
          %171 = sbr.rel (%p169) target = $region16
        $region15: #{tpu_custom_call.1} parent=11 // pred_region
          %s173 = ssub.s32 64, 64
          %174 = vsyncadd [#allocation6], %s173
          %s176 = sshll.u32 [#allocation5], 4
          %s177 = int_to_ptr.vmem [resolvable:$true] %s176
          %179 = dma.hbm_to_vmem [thread:$0]  %s1, 64, %s177, [#allocation6]
        $region16: #{tpu_custom_call.1} parent=11 // pred_fallthru
          _
        // Predicated region
        $region17: #{tpu_custom_call.1} parent=11 // pred_check
          %p180 = pneg %p86
        $region18: #{tpu_custom_call.1} parent=11 // pred_check_branch
          %182 = sbr.rel (%p180) target = $region20
        $region19: #{tpu_custom_call.1} parent=11 // pred_region
          _
        $region20: #{tpu_custom_call.1} parent=11 // pred_fallthru
          _
        // Predicated region
        $region21: #{tpu_custom_call.1} parent=11 // pred_check
          %p183 = pneg %p107
        $region22: #{tpu_custom_call.1} parent=11 // pred_check_branch
          %185 = sbr.rel (%p183) target = $region24
        $region23: #{tpu_custom_call.1} parent=11 // pred_region
          _
        $region24: #{tpu_custom_call.1} parent=11 // pred_fallthru
          _
        // Predicated region
        $region25: #{tpu_custom_call.1} parent=11 // pred_check
          %p186 = pneg %p128
        $region26: #{tpu_custom_call.1} parent=11 // pred_check_branch
          %188 = sbr.rel (%p186) target = $region28
        $region27: #{tpu_custom_call.1} parent=11 // pred_region
          %s190 = ssub.s32 512, 512
          %191 = vsyncadd [#allocation6], %s190
          %s192 = sshll.u32 [#allocation7], 4
          %s193 = int_to_ptr.vmem [resolvable:$true] %s192
          %198 = dma.hbm_to_vmem [thread:$0]  %s4, 512, %s193, [#allocation6], 256, 256, 16
        $region28: #{tpu_custom_call.1} parent=11 // pred_fallthru
          _
      $region12: #{tpu_custom_call.1} parent=5 // pred_fallthru
        _
      %p199 = scmp.lt.s32.totalorder %s18, 2
      // Predicated region
      $region29: #{tpu_custom_call.1} parent=5 // pred_check
        %p200 = pneg %p199
      $region30: #{tpu_custom_call.1} parent=5 // pred_check_branch
        %202 = sbr.rel (%p200) target = $region32
      $region31: #{tpu_custom_call.1} parent=5 // pred_region
        // Predicated region
        $region33: #{tpu_custom_call.1} parent=31 // pred_check
          %p203 = pneg %p38
        $region34: #{tpu_custom_call.1} parent=31 // pred_check_branch
          %205 = sbr.rel (%p203) target = $region36
        $region35: #{tpu_custom_call.1} parent=31 // pred_region
          %s206 = sand.u32 %s28, 1
          %s207 = scalar_lea.sflag [#allocation3], %s206
          %s208 = sand.u32 %s28, 1
          %s209 = smul.addr %s208, 8
          %s210 = scalar_lea.vmem [#allocation2], %s209
          %s212 = ssub.s32 128, 128
          %213 = vsyncadd %s207, %s212
          %s214 = smul.addr %s18, 2
          %s215 = smul.addr %s214, 64
          %s216 = scalar_lea.hbm %s0, %s215
          %s218 = sshll.u32 %s210, 4
          %s219 = int_to_ptr.vmem [resolvable:$true] %s218
          %221 = dma.hbm_to_vmem [thread:$0]  %s216, 128, %s219, %s207
        $region36: #{tpu_custom_call.1} parent=31 // pred_fallthru
          _
      $region32: #{tpu_custom_call.1} parent=5 // pred_fallthru
        _
      %p222 = scmp.le.s32.totalorder 1, %s18
      %p223 = scmp.lt.s32.totalorder %s18, 3
      %p224 = pnand %p222, %p223
      %p225 = pneg %p224
      // Predicated region
      $region37: #{tpu_custom_call.1} parent=5 // pred_check
        _
      $region38: #{tpu_custom_call.1} parent=5 // pred_check_branch
        %227 = sbr.rel (%p224) target = $region40
      $region39: #{tpu_custom_call.1} parent=5 // pred_region
        %s228 = ssub.s32 %s18, 1
        %s229 = sand.u32 %s31, 1
        %s230 = scalar_lea.sflag [#allocation3], %s229
        %s231 = sand.u32 %s31, 1
        %s232 = smul.addr %s231, 8
        %s233 = scalar_lea.vmem [#allocation2], %s232
        // Predicated region
        $region41: #{tpu_custom_call.1} parent=39 // pred_check
          %p234 = pneg %p44
        $region42: #{tpu_custom_call.1} parent=39 // pred_check_branch
          %236 = sbr.rel (%p234) target = $region44
        $region43: #{tpu_custom_call.1} parent=39 // pred_region
          %237 = dma.done %s230, 128
        $region44: #{tpu_custom_call.1} parent=39 // pred_fallthru
          _
        // Predicated region
        $region45: #{tpu_custom_call.1} parent=39 // pred_check
          %p238 = pneg %p65
        $region46: #{tpu_custom_call.1} parent=39 // pred_check_branch
          %240 = sbr.rel (%p238) target = $region48
        $region47: #{tpu_custom_call.1} parent=39 // pred_region
          %241 = dma.done [#allocation6], 64
        $region48: #{tpu_custom_call.1} parent=39 // pred_fallthru
          _
        // Predicated region
        $region49: #{tpu_custom_call.1} parent=39 // pred_check
          %p242 = pneg %p128
        $region50: #{tpu_custom_call.1} parent=39 // pred_check_branch
          %244 = sbr.rel (%p242) target = $region52
        $region51: #{tpu_custom_call.1} parent=39 // pred_region
          %245 = dma.done [#allocation6], 512
        $region52: #{tpu_custom_call.1} parent=39 // pred_fallthru
          _
        %s246 = sand.u32 %s31, 1
        %s247 = scalar_lea.sflag [#allocation3], %s246
        %s248 = sand.u32 %s31, 1
        %s249 = smul.addr %s248, 8
        %s250 = scalar_lea.vmem [#allocation2], %s249
        %p251 = pneg %p44
        %p252 = pneg %p41
        %p253 = pneg %p65
        %p254 = pneg %p62
        %p255 = pneg %p86
        %p256 = pneg %p83
        %p257 = pneg %p107
        %p258 = pneg %p104
        %p259 = pneg %p128
        %p260 = pneg %p125
        %p261 = pneg %p154
        %p262 = pneg %p151
        %s263 = sand.u32 %s141, 1
        %s264 = scalar_lea.sflag [#allocation4], %s263
        %s265 = sand.u32 %s141, 1
        %s266 = smul.addr %s265, 8
        %s267 = scalar_lea.vmem [#allocation8], %s266
        %v268 = vld [vmem:[%s233] sm:$0xff]
        %v269 = vld [vmem:[%s3] sm:$0xf]
        %v270 = vld [vmem:[#allocation7] sm:$0xff]
        %v271 = vld [vmem:[#allocation7 + $0x8] sm:$0xff]
        %v272 = vld [vmem:[#allocation7 + $0x10] sm:$0x1]
        %v273 = vld [vmem:[#allocation7 + $0x18] sm:$0x1]
        %275 = vset.pattern.permute.xlu0 0
        %276 = vperm.xlu0 %275, %v269
        %v277 = vpop.permute.xlu0 %276
        %v279 = vunpack.c.l.s4 839922192
        %v280 = vunpack.c.0.s8 %v279
        %v281 = vlaneseq
        %v282 = vshrl.u32 %v281, 7
        %v283 = vsub.s32 %v280, %v282
        %v284 = vrot.slane %v277, %v283
        %v286 = vmul.f32 %v268, %v284
        %287 = vset.pattern.permute.xlu0 1
        %288 = vperm.xlu0 %287, %v269
        %v289 = vpop.permute.xlu0 %288
        %v291 = vunpack.c.l.s4 839922192
        %v292 = vunpack.c.0.s8 %v291
        %v293 = vlaneseq
        %v294 = vshrl.u32 %v293, 7
        %v295 = vsub.s32 %v292, %v294
        %v296 = vrot.slane %v289, %v295
        %v298 = vadd.f32 %v286, %v296
        %v300 = vcombine.high %v298, %v298
        %302 = vrot.lane.b32.xlu0 %v298, 17
        %v303 = vpop.permute.xlu0 %302
        %304 = vrot.lane.b32.xlu0 %v300, 17
        %v305 = vpop.permute.xlu0 %304
        %v306 = vlaneseq
        %v307 = vand.u32 %v306, 127
        %vm308 = vcmp.lt.s32.totalorder %v307, 17
        %v309 = vsel %vm308, %v303, %v305
        %v310 = vsel %vm308, %v305, %v303
        %v311 = vlaneseq
        %v312 = vshrl.u32 %v311, 7
        %v313 = vsub.s32 0, %v312
        %v314 = vrot.slane %v270, %v313
        %v315 = vlaneseq
        %v316 = vshrl.u32 %v315, 7
        %v317 = vsub.s32 0, %v316
        %v318 = vrot.slane %v271, %v317
        %v319 = vmul.f32 %v310, %v314
        %v320 = vmul.f32 %v309, %v318
        %321 = vrot.lane.b32.xlu0 %v298, 16
        %v322 = vpop.permute.xlu0 %321
        %323 = vrot.lane.b32.xlu0 %v300, 16
        %v324 = vpop.permute.xlu0 %323
        %vm325 = vcmp.lt.s32.totalorder %v307, 16
        %v326 = vsel %vm325, %v322, %v324
        %v327 = vsel %vm325, %v324, %v322
        %v328 = vlaneseq
        %v329 = vshrl.u32 %v328, 7
        %v330 = vsub.s32 1, %v329
        %v331 = vrot.slane %v270, %v330
        %v332 = vlaneseq
        %v333 = vshrl.u32 %v332, 7
        %v334 = vsub.s32 1, %v333
        %v335 = vrot.slane %v271, %v334
        %v336 = vmul.f32 %v327, %v331
        %v337 = vmul.f32 %v326, %v335
        %338 = vrot.lane.b32.xlu0 %v298, 15
        %v339 = vpop.permute.xlu0 %338
        %340 = vrot.lane.b32.xlu0 %v300, 15
        %v341 = vpop.permute.xlu0 %340
        %vm342 = vcmp.lt.s32.totalorder %v307, 15
        %v343 = vsel %vm342, %v339, %v341
        %v344 = vsel %vm342, %v341, %v339
        %v345 = vlaneseq
        %v346 = vshrl.u32 %v345, 7
        %v347 = vsub.s32 2, %v346
        %v348 = vrot.slane %v270, %v347
        %v349 = vlaneseq
        %v350 = vshrl.u32 %v349, 7
        %v351 = vsub.s32 2, %v350
        %v352 = vrot.slane %v271, %v351
        %v353 = vmul.f32 %v344, %v348
        %v354 = vmul.f32 %v343, %v352
        %355 = vrot.lane.b32.xlu0 %v298, 1
        %v356 = vpop.permute.xlu0 %355
        %357 = vrot.lane.b32.xlu0 %v300, 1
        %v358 = vpop.permute.xlu0 %357
        %vm359 = vcmp.lt.s32.totalorder %v307, 1
        %v360 = vsel %vm359, %v356, %v358
        %v361 = vsel %vm359, %v358, %v356
        %v362 = vlaneseq
        %v363 = vshrl.u32 %v362, 7
        %v364 = vsub.s32 3, %v363
        %v365 = vrot.slane %v270, %v364
        %v366 = vlaneseq
        %v367 = vshrl.u32 %v366, 7
        %v368 = vsub.s32 3, %v367
        %v369 = vrot.slane %v271, %v368
        %v370 = vmul.f32 %v361, %v365
        %v371 = vmul.f32 %v360, %v369
        %v372 = vlaneseq
        %v373 = vshrl.u32 %v372, 7
        %v374 = vsub.s32 4, %v373
        %v375 = vrot.slane %v270, %v374
        %v376 = vlaneseq
        %v377 = vshrl.u32 %v376, 7
        %v378 = vsub.s32 4, %v377
        %v379 = vrot.slane %v271, %v378
        %v382 = vcombine.low %v375, %v379
        %v384 = vmul.f32 %v298, %v382
        %385 = vrot.lane.b32.xlu0 %v298, 127
        %v386 = vpop.permute.xlu0 %385
        %387 = vrot.lane.b32.xlu0 %v300, 127
        %v388 = vpop.permute.xlu0 %387
        %vm389 = vcmp.lt.s32.totalorder %v307, 127
        %v390 = vsel %vm389, %v386, %v388
        %v391 = vsel %vm389, %v388, %v386
        %v392 = vlaneseq
        %v393 = vshrl.u32 %v392, 7
        %v394 = vsub.s32 5, %v393
        %v395 = vrot.slane %v270, %v394
        %v396 = vlaneseq
        %v397 = vshrl.u32 %v396, 7
        %v398 = vsub.s32 5, %v397
        %v399 = vrot.slane %v271, %v398
        %v400 = vmul.f32 %v390, %v395
        %v401 = vmul.f32 %v391, %v399
        %402 = vrot.lane.b32.xlu0 %v298, 113
        %v403 = vpop.permute.xlu0 %402
        %404 = vrot.lane.b32.xlu0 %v300, 113
        %v405 = vpop.permute.xlu0 %404
        %vm406 = vcmp.lt.s32.totalorder %v307, 113
        %v407 = vsel %vm406, %v403, %v405
        %v408 = vsel %vm406, %v405, %v403
        %v409 = vlaneseq
        %v410 = vshrl.u32 %v409, 7
        %v411 = vsub.s32 6, %v410
        %v412 = vrot.slane %v270, %v411
        %v413 = vlaneseq
        %v414 = vshrl.u32 %v413, 7
        %v415 = vsub.s32 6, %v414
        %v416 = vrot.slane %v271, %v415
        %v417 = vmul.f32 %v407, %v412
        %v418 = vmul.f32 %v408, %v416
        %419 = vrot.lane.b32.xlu0 %v298, 112
        %v420 = vpop.permute.xlu0 %419
        %421 = vrot.lane.b32.xlu0 %v300, 112
        %v422 = vpop.permute.xlu0 %421
        %vm423 = vcmp.lt.s32.totalorder %v307, 112
        %v424 = vsel %vm423, %v420, %v422
        %v425 = vsel %vm423, %v422, %v420
        %v426 = vlaneseq
        %v427 = vshrl.u32 %v426, 7
        %v428 = vsub.s32 7, %v427
        %v429 = vrot.slane %v270, %v428
        %v430 = vlaneseq
        %v431 = vshrl.u32 %v430, 7
        %v432 = vsub.s32 7, %v431
        %v433 = vrot.slane %v271, %v432
        %v434 = vmul.f32 %v424, %v429
        %v435 = vmul.f32 %v425, %v433
        %436 = vrot.lane.b32.xlu0 %v298, 111
        %v437 = vpop.permute.xlu0 %436
        %438 = vrot.lane.b32.xlu0 %v300, 111
        %v439 = vpop.permute.xlu0 %438
        %vm440 = vcmp.lt.s32.totalorder %v307, 111
        %v441 = vsel %vm440, %v437, %v439
        %v442 = vsel %vm440, %v439, %v437
        %v443 = vlaneseq
        %v444 = vshrl.u32 %v443, 7
        %v445 = vsub.s32 0, %v444
        %v446 = vrot.slane %v272, %v445
        %v447 = vlaneseq
        %v448 = vshrl.u32 %v447, 7
        %v449 = vsub.s32 0, %v448
        %v450 = vrot.slane %v273, %v449
        %v451 = vmul.f32 %v441, %v446
        %v452 = vmul.f32 %v442, %v450
        %v455 = vrot.slane %v336, 4
        %v456 = vrot.slane %v337, 4
        %v461 = vrot.slane %v370, 4
        %v462 = vrot.slane %v371, 4
        %v466 = vcombine.high %v384, %v384
        %v470 = vrot.slane %v400, 4
        %v471 = vrot.slane %v401, 4
        %v476 = vrot.slane %v434, 4
        %v477 = vrot.slane %v435, 4
        %vm480 = vcmask 1043456
        %v481 = vsel %vm480, %v319, %v455
        %v482 = vsel %vm480, %v320, %v456
        %v483 = vsel %vm480, %v353, %v461
        %v484 = vsel %vm480, %v354, %v462
        %v485 = vsel %vm480, %v384, %v470
        %v486 = vsel %vm480, %v466, %v471
        %v487 = vsel %vm480, %v417, %v476
        %v488 = vsel %vm480, %v418, %v477
        %v489 = vld [vmem:[#allocation5] sm:$0xf]
        %490 = vset.pattern.permute.xlu0 2
        %491 = vperm.xlu0 %490, %v269
        %v492 = vpop.permute.xlu0 %491
        %vm494 = vcmask 293888
        %v496 = vsel %vm494, %v489, 0
        %v499 = vsel %vm480, %v451, 0
        %v502 = vsel %vm480, %v452, 0
        %504 = vmatprep.subr.mxu0 %v482
        %505 = vmatpush1.msra.mxu0 %v481
        %506 = vmatprep.subr.mxu0 %v484
        %507 = vmatpush1.msra.mxu0 %v483
        %508 = vmatprep.subr.mxu0 %v486
        %509 = vmatpush1.msra.mxu0 %v485
        %510 = vmatprep.subr.mxu0 %v488
        %511 = vmatpush1.msra.mxu0 %v487
        %512 = vmatprep.subr.mxu0 %v502
        %513 = vmatpush1.msra.mxu0 %v499
        %514 = vmatprep.subr.mxu0 0.0
        %515 = vmatpush1.msra.mxu0 0.0
        %516 = vmatprep.subr.mxu0 0.0
        %517 = vmatpush1.msra.mxu0 0.0
        %518 = vmatprep.subr.mxu0 0.0
        %519 = vmatpush1.msra.mxu0 0.0
        %520 = vmatprep.subr.mxu0 0.0
        %521 = vmatpush1.msra.mxu0 0.0
        %522 = vmatprep.subr.mxu0 0.0
        %523 = vmatpush1.msra.mxu0 0.0
        %524 = vmatprep.subr.mxu0 0.0
        %525 = vmatpush1.msra.mxu0 0.0
        %526 = vmatprep.subr.mxu0 0.0
        %527 = vmatpush1.msra.mxu0 0.0
        %528 = vmatprep.subr.mxu0 0.0
        %529 = vmatpush1.msra.mxu0 0.0
        %530 = vmatprep.subr.mxu0 0.0
        %531 = vmatpush1.msra.mxu0 0.0
        %532 = vmatprep.subr.mxu0 0.0
        %533 = vmatpush1.msra.mxu0 0.0
        %534 = vmatprep.subr.mxu0 0.0
        %535 = vmatpush1.msra.mxu0 0.0
        %536 = vmatprep.subr.mxu0 0.0
        %537 = vmatpush1.msra.mxu0 0.0
        %538 = vmatprep.subr.mxu0 0.0
        %539 = vmatpush1.msra.mxu0 0.0
        %540 = vmatprep.subr.mxu0 0.0
        %541 = vmatpush1.msra.mxu0 0.0
        %542 = vmatprep.subr.mxu0 0.0
        %543 = vmatpush1.msra.mxu0 0.0
        %544 = vmatprep.subr.mxu0 0.0
        %545 = vmatpush1.msra.mxu0 0.0
        %546 = vmatprep.subr.mxu0 0.0
        %547 = vmatpush1.msra.mxu0 0.0
        %548 = vmatprep.subr.mxu0 0.0
        %549 = vmatpush1.msra.mxu0 0.0
        %550 = vmatprep.subr.mxu0 0.0
        %551 = vmatpush1.msra.mxu0 0.0
        %552 = vmatprep.subr.mxu0 0.0
        %553 = vmatpush1.msra.mxu0 0.0
        %554 = vmatprep.subr.mxu0 0.0
        %555 = vmatpush1.msra.mxu0 0.0
        %556 = vmatprep.subr.mxu0 0.0
        %557 = vmatpush1.msra.mxu0 0.0
        %558 = vmatprep.subr.mxu0 0.0
        %559 = vmatpush1.msra.mxu0 0.0
        %560 = vmatprep.subr.mxu0 0.0
        %561 = vmatpush1.msra.mxu0 0.0
        %562 = vmatprep.subr.mxu0 0.0
        %563 = vmatpush1.msra.mxu0 0.0
        %564 = vmatprep.subr.mxu0 0.0
        %565 = vmatpush1.msra.mxu0 0.0
        %566 = vmatprep.subr.mxu0 0.0
        %567 = vmatpush1.msra.mxu0 0.0
        %568 = vmatprep.mubr.f32.mxu0 0.0
        %569 = vmatmul.mubr.f32.gmra.mrb[0].mxu0 %v496
        %v570 = vpop.f32.mrb[0].mxu0
        %v571 = vadd.f32 %v492, %v570
        %v572 = vpop.f32.mrb[0].mxu0
        %v573 = vadd.f32 %v492, %v572
        %574 = vdwg.mxu0
        %vm575 = vcmp.gt.f32.partialorder %v571, 0.0
        %vm576 = vcmp.gt.f32.partialorder %v573, 0.0
        %577 = vset.pattern.permute.xlu0 4
        %578 = vperm.xlu0 %577, %v269
        %v579 = vpop.permute.xlu0 %578
        %v581 = vmul.f32 %v579, %v571
        %v582 = vmul.f32 %v579, %v573
        %v583 = vsel %vm575, %v571, %v581
        %v584 = vsel %vm576, %v573, %v582
        %585 = vrot.lane.b32.xlu0 %v583, 17
        %v586 = vpop.permute.xlu0 %585
        %587 = vrot.lane.b32.xlu0 %v584, 17
        %v588 = vpop.permute.xlu0 %587
        %v589 = vsel %vm308, %v586, %v588
        %v590 = vsel %vm308, %v588, %v586
        %v591 = vmul.f32 %v590, %v314
        %v592 = vmul.f32 %v589, %v318
        %593 = vrot.lane.b32.xlu0 %v583, 16
        %v594 = vpop.permute.xlu0 %593
        %595 = vrot.lane.b32.xlu0 %v584, 16
        %v596 = vpop.permute.xlu0 %595
        %v597 = vsel %vm325, %v594, %v596
        %v598 = vsel %vm325, %v596, %v594
        %v599 = vmul.f32 %v598, %v331
        %v600 = vmul.f32 %v597, %v335
        %601 = vrot.lane.b32.xlu0 %v583, 15
        %v602 = vpop.permute.xlu0 %601
        %603 = vrot.lane.b32.xlu0 %v584, 15
        %v604 = vpop.permute.xlu0 %603
        %v605 = vsel %vm342, %v602, %v604
        %v606 = vsel %vm342, %v604, %v602
        %v607 = vmul.f32 %v606, %v348
        %v608 = vmul.f32 %v605, %v352
        %609 = vrot.lane.b32.xlu0 %v583, 1
        %v610 = vpop.permute.xlu0 %609
        %611 = vrot.lane.b32.xlu0 %v584, 1
        %v612 = vpop.permute.xlu0 %611
        %v613 = vsel %vm359, %v610, %v612
        %v614 = vsel %vm359, %v612, %v610
        %v615 = vmul.f32 %v614, %v365
        %v616 = vmul.f32 %v613, %v369
        %v617 = vmul.f32 %v583, %v375
        %v618 = vmul.f32 %v584, %v379
        %619 = vrot.lane.b32.xlu0 %v583, 127
        %v620 = vpop.permute.xlu0 %619
        %621 = vrot.lane.b32.xlu0 %v584, 127
        %v622 = vpop.permute.xlu0 %621
        %v623 = vsel %vm389, %v620, %v622
        %v624 = vsel %vm389, %v622, %v620
        %v625 = vmul.f32 %v623, %v395
        %v626 = vmul.f32 %v624, %v399
        %627 = vrot.lane.b32.xlu0 %v583, 113
        %v628 = vpop.permute.xlu0 %627
        %629 = vrot.lane.b32.xlu0 %v584, 113
        %v630 = vpop.permute.xlu0 %629
        %v631 = vsel %vm406, %v628, %v630
        %v632 = vsel %vm406, %v630, %v628
        %v633 = vmul.f32 %v631, %v412
        %v634 = vmul.f32 %v632, %v416
        %635 = vrot.lane.b32.xlu0 %v583, 112
        %v636 = vpop.permute.xlu0 %635
        %637 = vrot.lane.b32.xlu0 %v584, 112
        %v638 = vpop.permute.xlu0 %637
        %v639 = vsel %vm423, %v636, %v638
        %v640 = vsel %vm423, %v638, %v636
        %v641 = vmul.f32 %v639, %v429
        %v642 = vmul.f32 %v640, %v433
        %643 = vrot.lane.b32.xlu0 %v583, 111
        %v644 = vpop.permute.xlu0 %643
        %645 = vrot.lane.b32.xlu0 %v584, 111
        %v646 = vpop.permute.xlu0 %645
        %v647 = vsel %vm440, %v644, %v646
        %v648 = vsel %vm440, %v646, %v644
        %v649 = vmul.f32 %v647, %v446
        %v650 = vmul.f32 %v648, %v450
        %v653 = vrot.slane %v599, 4
        %v654 = vrot.slane %v600, 4
        %v659 = vrot.slane %v615, 4
        %v660 = vrot.slane %v616, 4
        %v665 = vrot.slane %v625, 4
        %v666 = vrot.slane %v626, 4
        %v671 = vrot.slane %v641, 4
        %v672 = vrot.slane %v642, 4
        %v675 = vsel %vm480, %v591, %v653
        %v676 = vsel %vm480, %v592, %v654
        %v677 = vsel %vm480, %v607, %v659
        %v678 = vsel %vm480, %v608, %v660
        %v679 = vsel %vm480, %v617, %v665
        %v680 = vsel %vm480, %v618, %v666
        %v681 = vsel %vm480, %v633, %v671
        %v682 = vsel %vm480, %v634, %v672
        %v683 = vld [vmem:[%s2] sm:$0xf]
        %684 = vset.pattern.permute.xlu0 3
        %685 = vperm.xlu0 %684, %v269
        %v686 = vpop.permute.xlu0 %685
        %v689 = vsel %vm494, %v683, 0
        %v692 = vsel %vm480, %v649, 0
        %v695 = vsel %vm480, %v650, 0
        %697 = vmatprep.subr.mxu0 %v676
        %698 = vmatpush1.msra.mxu0 %v675
        %699 = vmatprep.subr.mxu0 %v678
        %700 = vmatpush1.msra.mxu0 %v677
        %701 = vmatprep.subr.mxu0 %v680
        %702 = vmatpush1.msra.mxu0 %v679
        %703 = vmatprep.subr.mxu0 %v682
        %704 = vmatpush1.msra.mxu0 %v681
        %705 = vmatprep.subr.mxu0 %v695
        %706 = vmatpush1.msra.mxu0 %v692
        %707 = vmatprep.subr.mxu0 0.0
        %708 = vmatpush1.msra.mxu0 0.0
        %709 = vmatprep.subr.mxu0 0.0
        %710 = vmatpush1.msra.mxu0 0.0
        %711 = vmatprep.subr.mxu0 0.0
        %712 = vmatpush1.msra.mxu0 0.0
        %713 = vmatprep.subr.mxu0 0.0
        %714 = vmatpush1.msra.mxu0 0.0
        %715 = vmatprep.subr.mxu0 0.0
        %716 = vmatpush1.msra.mxu0 0.0
        %717 = vmatprep.subr.mxu0 0.0
        %718 = vmatpush1.msra.mxu0 0.0
        %719 = vmatprep.subr.mxu0 0.0
        %720 = vmatpush1.msra.mxu0 0.0
        %721 = vmatprep.subr.mxu0 0.0
        %722 = vmatpush1.msra.mxu0 0.0
        %723 = vmatprep.subr.mxu0 0.0
        %724 = vmatpush1.msra.mxu0 0.0
        %725 = vmatprep.subr.mxu0 0.0
        %726 = vmatpush1.msra.mxu0 0.0
        %727 = vmatprep.subr.mxu0 0.0
        %728 = vmatpush1.msra.mxu0 0.0
        %729 = vmatprep.subr.mxu0 0.0
        %730 = vmatpush1.msra.mxu0 0.0
        %731 = vmatprep.subr.mxu0 0.0
        %732 = vmatpush1.msra.mxu0 0.0
        %733 = vmatprep.subr.mxu0 0.0
        %734 = vmatpush1.msra.mxu0 0.0
        %735 = vmatprep.subr.mxu0 0.0
        %736 = vmatpush1.msra.mxu0 0.0
        %737 = vmatprep.subr.mxu0 0.0
        %738 = vmatpush1.msra.mxu0 0.0
        %739 = vmatprep.subr.mxu0 0.0
        %740 = vmatpush1.msra.mxu0 0.0
        %741 = vmatprep.subr.mxu0 0.0
        %742 = vmatpush1.msra.mxu0 0.0
        %743 = vmatprep.subr.mxu0 0.0
        %744 = vmatpush1.msra.mxu0 0.0
        %745 = vmatprep.subr.mxu0 0.0
        %746 = vmatpush1.msra.mxu0 0.0
        %747 = vmatprep.subr.mxu0 0.0
        %748 = vmatpush1.msra.mxu0 0.0
        %749 = vmatprep.subr.mxu0 0.0
        %750 = vmatpush1.msra.mxu0 0.0
        %751 = vmatprep.subr.mxu0 0.0
        %752 = vmatpush1.msra.mxu0 0.0
        %753 = vmatprep.subr.mxu0 0.0
        %754 = vmatpush1.msra.mxu0 0.0
        %755 = vmatprep.subr.mxu0 0.0
        %756 = vmatpush1.msra.mxu0 0.0
        %757 = vmatprep.subr.mxu0 0.0
        %758 = vmatpush1.msra.mxu0 0.0
        %759 = vmatprep.subr.mxu0 0.0
        %760 = vmatpush1.msra.mxu0 0.0
        %761 = vmatprep.mubr.f32.mxu0 0.0
        %762 = vmatmul.mubr.f32.gmra.mrb[0].mxu0 %v689
        %v763 = vpop.f32.mrb[0].mxu0
        %v764 = vadd.f32 %v686, %v763
        %v765 = vpop.f32.mrb[0].mxu0
        %v766 = vadd.f32 %v686, %v765
        %767 = vdwg.mxu0
        %v769 = vcombine.high %v268, %v268
        %v771 = vadd.f32 %v764, %v268
        %v772 = vadd.f32 %v766, %v769
        %v775 = vcombine.low %v771, %v772
        %777 = vst [vmem:[%s267] sm:$0xff] %v775
        %s778 = sand.u32 %s141, 1
        %s779 = scalar_lea.sflag [#allocation4], %s778
        %s780 = sand.u32 %s141, 1
        %s781 = smul.addr %s780, 8
        %s782 = scalar_lea.vmem [#allocation8], %s781
        // Predicated region
        $region53: #{tpu_custom_call.1} parent=39 // pred_check
          %p783 = pneg %p151
        $region54: #{tpu_custom_call.1} parent=39 // pred_check_branch
          %785 = sbr.rel (%p783) target = $region56
        $region55: #{tpu_custom_call.1} parent=39 // pred_region
          %s787 = ssub.s32 128, 128
          %788 = vsyncadd %s779, %s787
          %s789 = smul.addr %s23, 2
          %s790 = smul.addr %s789, 64
          %s791 = scalar_lea.hbm %s5, %s790
          %s793 = sshll.u32 %s782, 4
          %s794 = int_to_ptr.vmem [resolvable:$true] %s793
          %796 = dma.vmem_to_hbm [thread:$0]  %s794, 128, %s791, %s779
        $region56: #{tpu_custom_call.1} parent=39 // pred_fallthru
          _
      $region40: #{tpu_custom_call.1} parent=5 // pred_fallthru
        _
      %p797 = scmp.le.s32.totalorder 2, %s18
      // Predicated region
      $region57: #{tpu_custom_call.1} parent=5 // pred_check
        %p798 = pneg %p797
      $region58: #{tpu_custom_call.1} parent=5 // pred_check_branch
        %800 = sbr.rel (%p798) target = $region60
      $region59: #{tpu_custom_call.1} parent=5 // pred_region
        %s801 = ssub.s32 %s18, 2
        // Predicated region
        $region61: #{tpu_custom_call.1} parent=59 // pred_check
          %p802 = pneg %p157
        $region62: #{tpu_custom_call.1} parent=59 // pred_check_branch
          %804 = sbr.rel (%p802) target = $region64
        $region63: #{tpu_custom_call.1} parent=59 // pred_region
          %s805 = sand.u32 %s142, 1
          %s806 = scalar_lea.sflag [#allocation4], %s805
          %s807 = sand.u32 %s142, 1
          %s808 = smul.addr %s807, 8
          %s809 = scalar_lea.vmem [#allocation8], %s808
          %810 = dma.done %s806, 128
        $region64: #{tpu_custom_call.1} parent=59 // pred_fallthru
          _
      $region60: #{tpu_custom_call.1} parent=5 // pred_fallthru
        _
    $region6: #{tpu_custom_call.1} parent=1 // loop_footer
      %s22 = sadd.s32 1, %s18
    $region7: #{tpu_custom_call.1} parent=1 // loop_footer_branch
      %17 = sbr.rel target = $region3
    $region8: #{tpu_custom_call.1} parent=1 // loop_exit
      _
    %811 = vsyncpa [#allocation3], 1
    %s812 = scalar_lea.sflag [#allocation3], 1
    %813 = vsyncpa %s812, 1
    %814 = vsyncpa [#allocation6], 1
    %815 = vsyncpa [#allocation4], 1
    %s816 = scalar_lea.sflag [#allocation4], 1
    %817 = vsyncpa %s816, 1

</llo_original>
